<compile_context>
chip_gen: v7x
topology: tpu7x:2x2x1
jax: 0.10.0
libtpu: 0.0.40
codegen_flags: <defaults>
</compile_context>

<pallas_src>
import functools

import jax
import jax.numpy as jnp
from jax.experimental import pallas as pl
from jax.experimental.pallas import tpu as pltpu

NUM_TZZ = 48
H1 = 24
H2 = 12
OUT = 1

# Default batch tile: large enough to amortize the ~0.35 us per-grid-step
# overhead against the HBM stream, small enough to double-buffer comfortably
# in VMEM on every generation (incl. v7x).
DEFAULT_BLOCK_B = 8192


def _round_up(n, m):
    return (n + m - 1) // m * m


def mlp_kernel(x_ref, w1_ref, b1_ref, w2_ref, b2_ref, w3_ref, b3_ref, o_ref):
    # x tile: (TB, 48) f32 -> bf16 operands for the MXU; accumulate in f32.
    x = x_ref[...].astype(jnp.bfloat16)
    # fc1 + relu
    h1 = jnp.dot(x, w1_ref[...], preferred_element_type=jnp.float32)
    h1 = jnp.maximum(h1 + b1_ref[...], 0.0)
    # fc2 + relu
    h2 = jnp.dot(h1.astype(jnp.bfloat16), w2_ref[...],
                 preferred_element_type=jnp.float32)
    h2 = jnp.maximum(h2 + b2_ref[...], 0.0)
    # fc3 + sigmoid
    z = jnp.dot(h2.astype(jnp.bfloat16), w3_ref[...],
                preferred_element_type=jnp.float32)
    y = jax.nn.sigmoid(z + b3_ref[...])          # (TB, 1) f32
    # Lane-dense store: (TB, 1) -> (1, TB) (XLU, separate issue slot) so the
    # output write is a full 128-lane store rather than a masked one.
    o_ref[...] = y.T


@functools.partial(jax.jit, static_argnames=("block_b",))
def mlp_forward(x, w1, b1, w2, b2, w3, b3, *, block_b=DEFAULT_BLOCK_B):
    """x: (B, NUM_TZZ) f32. Weights pre-transposed to (in, out); biases (1, out)."""
    B = x.shape[0]
    tb = min(block_b, _round_up(B, 128))         # multiple of 128 -> lane dense
    num_tiles = pl.cdiv(B, tb)
    b_pad = num_tiles * tb
    if b_pad != B:
        x = jnp.pad(x, ((0, b_pad - B), (0, 0)))

    # bf16 weight copies (f32 accumulation in-kernel); biases stay f32.
    w1b, w2b, w3b = (w.astype(jnp.bfloat16) for w in (w1, w2, w3))

    const = lambda shape: pl.BlockSpec(shape, lambda i: (0,) * len(shape))

    weight_bytes = (2 * (w1b.size + w2b.size + w3b.size)
                    + 4 * (b1.size + b2.size + b3.size))
    cost = pl.CostEstimate(
        flops=2 * b_pad * (NUM_TZZ * H1 + H1 * H2 + H2 * OUT),
        transcendentals=b_pad,                   # one exp per row (sigmoid)
        bytes_accessed=b_pad * NUM_TZZ * 4 + b_pad * 4 + weight_bytes,
    )

    out = pl.pallas_call(
        mlp_kernel,
        out_shape=jax.ShapeDtypeStruct((num_tiles, tb), jnp.float32),
        grid_spec=pltpu.PrefetchScalarGridSpec(
            num_scalar_prefetch=0,
            grid=(num_tiles,),
            in_specs=[
                pl.BlockSpec((tb, NUM_TZZ), lambda i: (i, 0)),  # streamed x tile
                const(w1b.shape), const(b1.shape),              # resident params
                const(w2b.shape), const(b2.shape),
                const(w3b.shape), const(b3.shape),
            ],
            out_specs=pl.BlockSpec((1, tb), lambda i: (i, 0)),  # lane-dense rows
        ),
        compiler_params=pltpu.CompilerParams(
            dimension_semantics=("parallel",),                  # megacore on v7x
        ),
        cost_estimate=cost,
    )(x, w1b, b1, w2b, b2, w3b, b3)

    # (num_tiles, TB) -> flat batch order -> (B, 1)
    return out.reshape(-1)[:B].reshape(B, OUT)


def init_params(key):
    """Deterministic init mimicking nn.Linear's U(-1/sqrt(fan_in), +)."""
    ks = jax.random.split(key, 6)

    def lin(kw, kb, fan_in, fan_out):
        bound = 1.0 / jnp.sqrt(fan_in)
        # stored pre-transposed: (in, out), so kernel computes x @ W + b
        w = jax.random.uniform(kw, (fan_in, fan_out), jnp.float32, -bound, bound)
        b = jax.random.uniform(kb, (1, fan_out), jnp.float32, -bound, bound)
        return w, b

    w1, b1 = lin(ks[0], ks[1], NUM_TZZ, H1)
    w2, b2 = lin(ks[2], ks[3], H1, H2)
    w3, b3 = lin(ks[4], ks[5], H2, OUT)
    return w1, b1, w2, b2, w3, b3


def _reference(x, w1, b1, w2, b2, w3, b3):
    h = jnp.maximum(x @ w1 + b1, 0.0)
    h = jnp.maximum(h @ w2 + b2, 0.0)
    return jax.nn.sigmoid(h @ w3 + b3)


if __name__ == "__main__":
    key = jax.random.PRNGKey(0)
    kx, kp = jax.random.split(key)
    params = init_params(kp)

    # Small single-tile case.
    batch = 8
    x = jax.random.normal(kx, (batch, NUM_TZZ), dtype=jnp.float32)
    out = jax.block_until_ready(mlp_forward(x, *params))
    ref = _reference(x, *params)
    assert out.shape == (batch, OUT)
    # bf16 matmul operands (f32 accumulation) -> loosened tolerance vs f32 ref.
    assert jnp.allclose(out, ref, atol=2e-2), "mismatch vs reference (single tile)"

    # Multi-tile case exercising the batch grid + padding (small forced tile).
    batch2 = 300
    x2 = jax.random.normal(jax.random.fold_in(kx, 1), (batch2, NUM_TZZ),
                           dtype=jnp.float32)
    out2 = jax.block_until_ready(mlp_forward(x2, *params, block_b=128))
    ref2 = _reference(x2, *params)
    assert out2.shape == (batch2, OUT)
    assert jnp.allclose(out2, ref2, atol=2e-2), "mismatch vs reference (multi tile)"

    print("KERNEL_OK")
</pallas_src>

<mosaic_0001>
module attributes {stable_mosaic.version = 11 : i64} {
  func.func @mlp_kernel(%arg0: i32, %arg1: memref<128x48xf32, #tpu.memory_space<vmem>>, %arg2: memref<48x24xbf16, #tpu.memory_space<vmem>>, %arg3: memref<1x24xf32, #tpu.memory_space<vmem>>, %arg4: memref<24x12xbf16, #tpu.memory_space<vmem>>, %arg5: memref<1x12xf32, #tpu.memory_space<vmem>>, %arg6: memref<12x1xbf16, #tpu.memory_space<vmem>>, %arg7: memref<1x1xf32, #tpu.memory_space<vmem>>, %arg8: memref<1x128xf32, #tpu.memory_space<vmem>>) attributes {dimension_semantics = [#tpu.dimension_semantics<parallel>], iteration_bounds = array<i64: 1>, scalar_prefetch = 0 : i64, scratch_operands = 0 : i64, tpu.core_type = #tpu.core_type<tc>, window_params = [{transform_indices = @transform_0, window_bounds = array<i64: 128, 48>}, {pipeline_mode = #tpu.pipeline_mode<synchronous>, transform_indices = @transform_1, window_bounds = array<i64: 48, 24>}, {pipeline_mode = #tpu.pipeline_mode<synchronous>, transform_indices = @transform_2, window_bounds = array<i64: 1, 24>}, {pipeline_mode = #tpu.pipeline_mode<synchronous>, transform_indices = @transform_3, window_bounds = array<i64: 24, 12>}, {pipeline_mode = #tpu.pipeline_mode<synchronous>, transform_indices = @transform_4, window_bounds = array<i64: 1, 12>}, {pipeline_mode = #tpu.pipeline_mode<synchronous>, transform_indices = @transform_5, window_bounds = array<i64: 12, 1>}, {pipeline_mode = #tpu.pipeline_mode<synchronous>, transform_indices = @transform_6, window_bounds = array<i64: 1, 1>}, {transform_indices = @transform_7, window_bounds = array<i64: 1, 128>}]} {
    %c0 = arith.constant 0 : index
    %c0_0 = arith.constant 0 : index
    %0 = vector.load %arg1[%c0, %c0_0] : memref<128x48xf32, #tpu.memory_space<vmem>>, vector<128x48xf32>
    %1 = arith.truncf %0 : vector<128x48xf32> to vector<128x48xbf16>
    %c0_1 = arith.constant 0 : index
    %c0_2 = arith.constant 0 : index
    %2 = vector.load %arg2[%c0_1, %c0_2] : memref<48x24xbf16, #tpu.memory_space<vmem>>, vector<48x24xbf16>
    %cst = arith.constant dense<0.000000e+00> : vector<128x24xf32>
    %3 = tpu.matmul %1, %2, %cst {dimension_numbers = #tpu.dot_dimension_numbers<[1], [0], [0], [1], [0, 0, 1, 1], [], []>} : vector<128x48xbf16>, vector<48x24xbf16>, vector<128x24xf32> -> vector<128x24xf32>
    %c0_3 = arith.constant 0 : index
    %c0_4 = arith.constant 0 : index
    %4 = vector.load %arg3[%c0_3, %c0_4] : memref<1x24xf32, #tpu.memory_space<vmem>>, vector<1x24xf32>
    %5 = vector.broadcast %4 : vector<1x24xf32> to vector<128x24xf32>
    %6 = arith.addf %3, %5 : vector<128x24xf32>
    %cst_5 = arith.constant 0.000000e+00 : f32
    %7 = vector.broadcast %cst_5 : f32 to vector<128x24xf32>
    %8 = arith.maximumf %6, %7 : vector<128x24xf32>
    %9 = arith.truncf %8 : vector<128x24xf32> to vector<128x24xbf16>
    %c0_6 = arith.constant 0 : index
    %c0_7 = arith.constant 0 : index
    %10 = vector.load %arg4[%c0_6, %c0_7] : memref<24x12xbf16, #tpu.memory_space<vmem>>, vector<24x12xbf16>
    %cst_8 = arith.constant dense<0.000000e+00> : vector<128x12xf32>
    %11 = tpu.matmul %9, %10, %cst_8 {dimension_numbers = #tpu.dot_dimension_numbers<[1], [0], [0], [1], [0, 0, 1, 1], [], []>} : vector<128x24xbf16>, vector<24x12xbf16>, vector<128x12xf32> -> vector<128x12xf32>
    %c0_9 = arith.constant 0 : index
    %c0_10 = arith.constant 0 : index
    %12 = vector.load %arg5[%c0_9, %c0_10] : memref<1x12xf32, #tpu.memory_space<vmem>>, vector<1x12xf32>
    %13 = vector.broadcast %12 : vector<1x12xf32> to vector<128x12xf32>
    %14 = arith.addf %11, %13 : vector<128x12xf32>
    %cst_11 = arith.constant 0.000000e+00 : f32
    %15 = vector.broadcast %cst_11 : f32 to vector<128x12xf32>
    %16 = arith.maximumf %14, %15 : vector<128x12xf32>
    %17 = arith.truncf %16 : vector<128x12xf32> to vector<128x12xbf16>
    %c0_12 = arith.constant 0 : index
    %c0_13 = arith.constant 0 : index
    %18 = vector.load %arg6[%c0_12, %c0_13] : memref<12x1xbf16, #tpu.memory_space<vmem>>, vector<12x1xbf16>
    %cst_14 = arith.constant dense<0.000000e+00> : vector<128x1xf32>
    %19 = tpu.matmul %17, %18, %cst_14 {dimension_numbers = #tpu.dot_dimension_numbers<[1], [0], [0], [1], [0, 0, 1, 1], [], []>} : vector<128x12xbf16>, vector<12x1xbf16>, vector<128x1xf32> -> vector<128x1xf32>
    %c0_15 = arith.constant 0 : index
    %c0_16 = arith.constant 0 : index
    %20 = vector.load %arg7[%c0_15, %c0_16] : memref<1x1xf32, #tpu.memory_space<vmem>>, vector<1x1xf32>
    %21 = vector.broadcast %20 : vector<1x1xf32> to vector<128x1xf32>
    %22 = arith.addf %19, %21 : vector<128x1xf32>
    %23 = arith.negf %22 : vector<128x1xf32>
    %24 = math.exp %23 : vector<128x1xf32>
    %cst_17 = arith.constant 1.000000e+00 : f32
    %25 = vector.broadcast %cst_17 : f32 to vector<128x1xf32>
    %26 = arith.addf %25, %24 : vector<128x1xf32>
    %27 = arith.divf %25, %26 : vector<128x1xf32>
    %28 = tpu.transpose %27, [1, 0] : vector<128x1xf32> -> vector<1x128xf32>
    %c0_18 = arith.constant 0 : index
    %c0_19 = arith.constant 0 : index
    %29 = vector.load %arg8[%c0_18, %c0_19] : memref<1x128xf32, #tpu.memory_space<vmem>>, vector<1x128xf32>
    tpu.vector_store %arg8[%c0_18, %c0_19], %28 {strides = array<i32>} : memref<1x128xf32, #tpu.memory_space<vmem>>, vector<1x128xf32>,
    return
  }
  func.func @transform_0(%arg0: i32) -> (i32, i32) {
    %c0_i32 = arith.constant 0 : i32
    %c0_i32_0 = arith.constant 0 : i32
    return %arg0, %c0_i32 : i32, i32
  }
  func.func @transform_1(%arg0: i32) -> (i32, i32) {
    %c0_i32 = arith.constant 0 : i32
    %c0_i32_0 = arith.constant 0 : i32
    %c0_i32_1 = arith.constant 0 : i32
    return %c0_i32, %c0_i32_0 : i32, i32
  }
  func.func @transform_2(%arg0: i32) -> (i32, i32) {
    %c0_i32 = arith.constant 0 : i32
    %c0_i32_0 = arith.constant 0 : i32
    %c0_i32_1 = arith.constant 0 : i32
    return %c0_i32, %c0_i32_0 : i32, i32
  }
  func.func @transform_3(%arg0: i32) -> (i32, i32) {
    %c0_i32 = arith.constant 0 : i32
    %c0_i32_0 = arith.constant 0 : i32
    %c0_i32_1 = arith.constant 0 : i32
    return %c0_i32, %c0_i32_0 : i32, i32
  }
  func.func @transform_4(%arg0: i32) -> (i32, i32) {
    %c0_i32 = arith.constant 0 : i32
    %c0_i32_0 = arith.constant 0 : i32
    %c0_i32_1 = arith.constant 0 : i32
    return %c0_i32, %c0_i32_0 : i32, i32
  }
  func.func @transform_5(%arg0: i32) -> (i32, i32) {
    %c0_i32 = arith.constant 0 : i32
    %c0_i32_0 = arith.constant 0 : i32
    %c0_i32_1 = arith.constant 0 : i32
    return %c0_i32, %c0_i32_0 : i32, i32
  }
  func.func @transform_6(%arg0: i32) -> (i32, i32) {
    %c0_i32 = arith.constant 0 : i32
    %c0_i32_0 = arith.constant 0 : i32
    %c0_i32_1 = arith.constant 0 : i32
    return %c0_i32, %c0_i32_0 : i32, i32
  }
  func.func @transform_7(%arg0: i32) -> (i32, i32) {
    %c0_i32 = arith.constant 0 : i32
    %c0_i32_0 = arith.constant 0 : i32
    return %arg0, %c0_i32 : i32, i32
  }
}

</mosaic_0001>

<llo_original>
// kernel: mlp_forward.1
$region0: #{mlp_forward.1}
  #allocation0 [shape = 'u32[]', space=smem, size = 0x4, offset = 0x4, fixed_abs, tag = 'smem constant byte address 0x4 - core index']
  #allocation1 [shape = 'u32[144,128]{1,0:T(1,128)}', space=vmem, size = 0x12000, scoped, tag = 'internal scratch']
  #allocation2 [shape = 'f32[1,1]{1,0:T(1,128)S(1)}', space=vmem, size = 0x200, scoped, tag = 'scoped memory for mlp_forward.1']
  %s0 = inlined_call_operand.vmem [shape: f32[128,48], index: 0, kind: input, shape index: {}]
  %s1 = inlined_call_operand.vmem [shape: bf16[48,24], index: 1, kind: input, shape index: {}]
  %s2 = inlined_call_operand.vmem [shape: f32[1,24], index: 2, kind: input, shape index: {}]
  %s3 = inlined_call_operand.vmem [shape: bf16[24,12], index: 3, kind: input, shape index: {}]
  %s4 = inlined_call_operand.vmem [shape: f32[1,12], index: 4, kind: input, shape index: {}]
  %s5 = inlined_call_operand.vmem [shape: bf16[12,1], index: 5, kind: input, shape index: {}]
  %s6 = inlined_call_operand.<no memory space> [shape: f32[1,1], index: 6, kind: input, shape index: {}]
  %s7 = inlined_call_operand.vmem [shape: f32[1,128], index: 7, kind: output, shape index: {}]
  %s8 = sld [smem:[#allocation0]]
  $region38: #{mlp_forward.1} parent=0
    _
  %s10 = ssub.s32 1, %s8
  %s11 = scalar_select 0, %s10, %s8
  %v12 = vstv %s6
  %13 = vst [vmem:[#allocation2] sm:$0x1] %v12
  // Predicated region
  $region2: #{mlp_forward.1} parent=0 // pred_check
    _
  $region3: #{mlp_forward.1} parent=0 // pred_check_branch
    %15 = sbr.rel (0) target = $region5
  $region4: #{mlp_forward.1} parent=0 // pred_region
    _
  $region5: #{mlp_forward.1} parent=0 // pred_fallthru
    _
  // Predicated region
  $region6: #{mlp_forward.1} parent=0 // pred_check
    _
  $region7: #{mlp_forward.1} parent=0 // pred_check_branch
    %17 = sbr.rel (0) target = $region9
  $region8: #{mlp_forward.1} parent=0 // pred_region
    _
  $region9: #{mlp_forward.1} parent=0 // pred_fallthru
    _
  // Predicated region
  $region10: #{mlp_forward.1} parent=0 // pred_check
    _
  $region11: #{mlp_forward.1} parent=0 // pred_check_branch
    %19 = sbr.rel (0) target = $region13
  $region12: #{mlp_forward.1} parent=0 // pred_region
    _
  $region13: #{mlp_forward.1} parent=0 // pred_fallthru
    _
  // Predicated region
  $region14: #{mlp_forward.1} parent=0 // pred_check
    _
  $region15: #{mlp_forward.1} parent=0 // pred_check_branch
    %21 = sbr.rel (0) target = $region17
  $region16: #{mlp_forward.1} parent=0 // pred_region
    _
  $region17: #{mlp_forward.1} parent=0 // pred_fallthru
    _
  // Predicated region
  $region18: #{mlp_forward.1} parent=0 // pred_check
    _
  $region19: #{mlp_forward.1} parent=0 // pred_check_branch
    %23 = sbr.rel (0) target = $region21
  $region20: #{mlp_forward.1} parent=0 // pred_region
    _
  $region21: #{mlp_forward.1} parent=0 // pred_fallthru
    _
  // Predicated region
  $region22: #{mlp_forward.1} parent=0 // pred_check
    _
  $region23: #{mlp_forward.1} parent=0 // pred_check_branch
    %25 = sbr.rel (0) target = $region25
  $region24: #{mlp_forward.1} parent=0 // pred_region
    _
  $region25: #{mlp_forward.1} parent=0 // pred_fallthru
    _
  // Predicated region
  $region26: #{mlp_forward.1} parent=0 // pred_check
    _
  $region27: #{mlp_forward.1} parent=0 // pred_check_branch
    %27 = sbr.rel (0) target = $region29
  $region28: #{mlp_forward.1} parent=0 // pred_region
    _
  $region29: #{mlp_forward.1} parent=0 // pred_fallthru
    _
  %v29 = vld [vmem:[%s0] sm:$0xff]
  %v30 = vld [vmem:[%s0 + $0x8] sm:$0xff]
  %v31 = vld [vmem:[%s0 + $0x10] sm:$0xff]
  %v32 = vld [vmem:[%s0 + $0x18] sm:$0xff]
  %v33 = vld [vmem:[%s0 + $0x20] sm:$0xff]
  %v34 = vld [vmem:[%s0 + $0x28] sm:$0xff]
  %v35 = vld [vmem:[%s0 + $0x30] sm:$0xff]
  %v36 = vld [vmem:[%s0 + $0x38] sm:$0xff]
  %v37 = vld [vmem:[%s0 + $0x40] sm:$0xff]
  %v38 = vld [vmem:[%s0 + $0x48] sm:$0xff]
  %v39 = vld [vmem:[%s0 + $0x50] sm:$0xff]
  %v40 = vld [vmem:[%s0 + $0x58] sm:$0xff]
  %v41 = vld [vmem:[%s0 + $0x60] sm:$0xff]
  %v42 = vld [vmem:[%s0 + $0x68] sm:$0xff]
  %v43 = vld [vmem:[%s0 + $0x70] sm:$0xff]
  %v44 = vld [vmem:[%s0 + $0x78] sm:$0xff]
  %v45 = vpack.c.bf16 %v30, %v29
  %v46 = vpack.c.bf16 %v32, %v31
  %v47 = vpack.c.bf16 %v34, %v33
  %v48 = vpack.c.bf16 %v36, %v35
  %v49 = vpack.c.bf16 %v38, %v37
  %v50 = vpack.c.bf16 %v40, %v39
  %v51 = vpack.c.bf16 %v42, %v41
  %v52 = vpack.c.bf16 %v44, %v43
  %v53 = vld [vmem:[%s1] sm:$0xf]
  %v54 = vld [vmem:[%s1 + $0x4] sm:$0xf]
  %v55 = vld [vmem:[%s1 + $0x8] sm:$0xf]
  %v56 = vld [vmem:[%s1 + $0xc] sm:$0xf]
  %v57 = vld [vmem:[%s1 + $0x10] sm:$0xf]
  %v58 = vld [vmem:[%s1 + $0x14] sm:$0xf]
  %v59 = vld [vmem:[%s2] sm:$0x1]
  %v61 = vlaneseq
  %v62 = vshrl.u32 %v61, 7
  %v63 = vsub.s32 0, %v62
  %v64 = vrot.slane %v59, %v63
  %v72 = vunpack.c.l.b16 %v53
  %v73 = vunpack.c.l.b16 %v54
  %v74 = vunpack.c.l.b16 %v55
  %v75 = vunpack.c.l.b16 %v56
  %v76 = vunpack.c.l.b16 %v57
  %v77 = vunpack.c.l.b16 %v58
  %v78 = vpack.c.b16 %v73, %v72
  %v79 = vpack.c.b16 %v75, %v74
  %v80 = vpack.c.b16 %v77, %v76
  %vm84 = vcmask 392192
  %v86 = vsel %vm84, %v45, 0
  %v89 = vsel %vm84, %v46, 0
  %v92 = vsel %vm84, %v47, 0
  %v95 = vsel %vm84, %v48, 0
  %v98 = vsel %vm84, %v49, 0
  %v101 = vsel %vm84, %v50, 0
  %v104 = vsel %vm84, %v51, 0
  %v107 = vsel %vm84, %v52, 0
  %109 = vmatprep.subr.bf16.mxu0 0
  %110 = vmatpush1.bf16.msra.mxu0 %v78
  %111 = vmatprep.subr.bf16.mxu0 0
  %112 = vmatpush1.bf16.msra.mxu0 %v79
  %113 = vmatprep.subr.bf16.mxu0 0
  %114 = vmatpush1.bf16.msra.mxu0 %v80
  %115 = vmatprep.subr.bf16.mxu0 0
  %116 = vmatpush1.bf16.msra.mxu0 0
  %117 = vmatprep.subr.bf16.mxu0 0
  %118 = vmatpush1.bf16.msra.mxu0 0
  %119 = vmatprep.subr.bf16.mxu0 0
  %120 = vmatpush1.bf16.msra.mxu0 0
  %121 = vmatprep.subr.bf16.mxu0 0
  %122 = vmatpush1.bf16.msra.mxu0 0
  %123 = vmatprep.subr.bf16.mxu0 0
  %124 = vmatpush1.bf16.msra.mxu0 0
  %125 = vmatprep.subr.bf16.mxu0 0
  %126 = vmatpush1.bf16.msra.mxu0 0
  %127 = vmatprep.subr.bf16.mxu0 0
  %128 = vmatpush1.bf16.msra.mxu0 0
  %129 = vmatprep.subr.bf16.mxu0 0
  %130 = vmatpush1.bf16.msra.mxu0 0
  %131 = vmatprep.subr.bf16.mxu0 0
  %132 = vmatpush1.bf16.msra.mxu0 0
  %133 = vmatprep.subr.bf16.mxu0 0
  %134 = vmatpush1.bf16.msra.mxu0 0
  %135 = vmatprep.subr.bf16.mxu0 0
  %136 = vmatpush1.bf16.msra.mxu0 0
  %137 = vmatprep.subr.bf16.mxu0 0
  %138 = vmatpush1.bf16.msra.mxu0 0
  %139 = vmatprep.subr.bf16.mxu0 0
  %140 = vmatpush1.bf16.msra.mxu0 0
  %141 = vmatprep.mubr.bf16.mxu0 0
  %142 = vmatmul.mubr.bf16.gmra.mrb[0].mxu0 %v86
  %v143 = vpop.f32.mrb[0].mxu0
  %v144 = vadd.f32 %v64, %v143
  %v145 = vpop.f32.mrb[0].mxu0
  %v146 = vpop.f32.mrb[0].mxu0
  %v147 = vadd.f32 %v64, %v146
  %v148 = vpop.f32.mrb[0].mxu0
  %149 = vmatprep.mubr.bf16.mxu0 0
  %150 = vmatmul.mubr.bf16.gmra.mrb[0].mxu0 %v89
  %v151 = vpop.f32.mrb[0].mxu0
  %v152 = vadd.f32 %v64, %v151
  %v153 = vpop.f32.mrb[0].mxu0
  %v154 = vpop.f32.mrb[0].mxu0
  %v155 = vadd.f32 %v64, %v154
  %v156 = vpop.f32.mrb[0].mxu0
  %157 = vmatprep.mubr.bf16.mxu0 0
  %158 = vmatmul.mubr.bf16.gmra.mrb[0].mxu0 %v92
  %v159 = vpop.f32.mrb[0].mxu0
  %v160 = vadd.f32 %v64, %v159
  %v161 = vpop.f32.mrb[0].mxu0
  %v162 = vpop.f32.mrb[0].mxu0
  %v163 = vadd.f32 %v64, %v162
  %v164 = vpop.f32.mrb[0].mxu0
  %165 = vmatprep.mubr.bf16.mxu0 0
  %166 = vmatmul.mubr.bf16.gmra.mrb[0].mxu0 %v95
  %v167 = vpop.f32.mrb[0].mxu0
  %v168 = vadd.f32 %v64, %v167
  %v169 = vpop.f32.mrb[0].mxu0
  %v170 = vpop.f32.mrb[0].mxu0
  %v171 = vadd.f32 %v64, %v170
  %v172 = vpop.f32.mrb[0].mxu0
  %173 = vmatprep.mubr.bf16.mxu0 0
  %174 = vmatmul.mubr.bf16.gmra.mrb[0].mxu0 %v98
  %v175 = vpop.f32.mrb[0].mxu0
  %v176 = vadd.f32 %v64, %v175
  %v177 = vpop.f32.mrb[0].mxu0
  %v178 = vpop.f32.mrb[0].mxu0
  %v179 = vadd.f32 %v64, %v178
  %v180 = vpop.f32.mrb[0].mxu0
  %181 = vmatprep.mubr.bf16.mxu0 0
  %182 = vmatmul.mubr.bf16.gmra.mrb[0].mxu0 %v101
  %v183 = vpop.f32.mrb[0].mxu0
  %v184 = vadd.f32 %v64, %v183
  %v185 = vpop.f32.mrb[0].mxu0
  %v186 = vpop.f32.mrb[0].mxu0
  %v187 = vadd.f32 %v64, %v186
  %v188 = vpop.f32.mrb[0].mxu0
  %189 = vmatprep.mubr.bf16.mxu0 0
  %190 = vmatmul.mubr.bf16.gmra.mrb[0].mxu0 %v104
  %v191 = vpop.f32.mrb[0].mxu0
  %v192 = vadd.f32 %v64, %v191
  %v193 = vpop.f32.mrb[0].mxu0
  %v194 = vpop.f32.mrb[0].mxu0
  %v195 = vadd.f32 %v64, %v194
  %v196 = vpop.f32.mrb[0].mxu0
  %197 = vmatprep.mubr.bf16.mxu0 0
  %198 = vmatmul.mubr.bf16.gmra.mrb[0].mxu0 %v107
  %v199 = vpop.f32.mrb[0].mxu0
  %v200 = vadd.f32 %v64, %v199
  %v201 = vpop.f32.mrb[0].mxu0
  %v202 = vpop.f32.mrb[0].mxu0
  %v203 = vadd.f32 %v64, %v202
  %v204 = vpop.f32.mrb[0].mxu0
  %205 = vdwg.mxu0
  %v206 = vmax.f32 %v144, 0.0
  %v207 = vmax.f32 %v147, 0.0
  %v208 = vmax.f32 %v152, 0.0
  %v209 = vmax.f32 %v155, 0.0
  %v210 = vmax.f32 %v160, 0.0
  %v211 = vmax.f32 %v163, 0.0
  %v212 = vmax.f32 %v168, 0.0
  %v213 = vmax.f32 %v171, 0.0
  %v214 = vmax.f32 %v176, 0.0
  %v215 = vmax.f32 %v179, 0.0
  %v216 = vmax.f32 %v184, 0.0
  %v217 = vmax.f32 %v187, 0.0
  %v218 = vmax.f32 %v192, 0.0
  %v219 = vmax.f32 %v195, 0.0
  %v220 = vmax.f32 %v200, 0.0
  %v221 = vmax.f32 %v203, 0.0
  %v222 = vpack.c.bf16 %v207, %v206
  %v223 = vpack.c.bf16 %v209, %v208
  %v224 = vpack.c.bf16 %v211, %v210
  %v225 = vpack.c.bf16 %v213, %v212
  %v226 = vpack.c.bf16 %v215, %v214
  %v227 = vpack.c.bf16 %v217, %v216
  %v228 = vpack.c.bf16 %v219, %v218
  %v229 = vpack.c.bf16 %v221, %v220
  %v230 = vld [vmem:[%s3] sm:$0xf]
  %v231 = vld [vmem:[%s3 + $0x4] sm:$0xf]
  %v232 = vld [vmem:[%s3 + $0x8] sm:$0xf]
  %v233 = vld [vmem:[%s4] sm:$0x1]
  %v235 = vlaneseq
  %v236 = vshrl.u32 %v235, 7
  %v237 = vsub.s32 0, %v236
  %v238 = vrot.slane %v233, %v237
  %v243 = vunpack.c.l.b16 %v230
  %v244 = vunpack.c.l.b16 %v231
  %v245 = vunpack.c.l.b16 %v232
  %v246 = vpack.c.b16 %v244, %v243
  %v247 = vpack.c.b16 %v245, %v245
  %vm249 = vcmask 195584
  %v251 = vsel %vm249, %v222, 0
  %v254 = vsel %vm249, %v223, 0
  %v257 = vsel %vm249, %v224, 0
  %v260 = vsel %vm249, %v225, 0
  %v263 = vsel %vm249, %v226, 0
  %v266 = vsel %vm249, %v227, 0
  %v269 = vsel %vm249, %v228, 0
  %v272 = vsel %vm249, %v229, 0
  %vm274 = vcmask 1043456
  %v276 = vsel %vm274, %v247, 0
  %278 = vmatprep.subr.bf16.mxu0 0
  %279 = vmatpush1.bf16.msra.mxu0 %v246
  %280 = vmatprep.subr.bf16.mxu0 0
  %281 = vmatpush1.bf16.msra.mxu0 %v276
  %282 = vmatprep.subr.bf16.mxu0 0
  %283 = vmatpush1.bf16.msra.mxu0 0
  %284 = vmatprep.subr.bf16.mxu0 0
  %285 = vmatpush1.bf16.msra.mxu0 0
  %286 = vmatprep.subr.bf16.mxu0 0
  %287 = vmatpush1.bf16.msra.mxu0 0
  %288 = vmatprep.subr.bf16.mxu0 0
  %289 = vmatpush1.bf16.msra.mxu0 0
  %290 = vmatprep.subr.bf16.mxu0 0
  %291 = vmatpush1.bf16.msra.mxu0 0
  %292 = vmatprep.subr.bf16.mxu0 0
  %293 = vmatpush1.bf16.msra.mxu0 0
  %294 = vmatprep.subr.bf16.mxu0 0
  %295 = vmatpush1.bf16.msra.mxu0 0
  %296 = vmatprep.subr.bf16.mxu0 0
  %297 = vmatpush1.bf16.msra.mxu0 0
  %298 = vmatprep.subr.bf16.mxu0 0
  %299 = vmatpush1.bf16.msra.mxu0 0
  %300 = vmatprep.subr.bf16.mxu0 0
  %301 = vmatpush1.bf16.msra.mxu0 0
  %302 = vmatprep.subr.bf16.mxu0 0
  %303 = vmatpush1.bf16.msra.mxu0 0
  %304 = vmatprep.subr.bf16.mxu0 0
  %305 = vmatpush1.bf16.msra.mxu0 0
  %306 = vmatprep.subr.bf16.mxu0 0
  %307 = vmatpush1.bf16.msra.mxu0 0
  %308 = vmatprep.subr.bf16.mxu0 0
  %309 = vmatpush1.bf16.msra.mxu0 0
  %310 = vmatprep.mubr.bf16.mxu0 0
  %311 = vmatmul.mubr.bf16.gmra.mrb[0].mxu0 %v251
  %v312 = vpop.f32.mrb[0].mxu0
  %v313 = vadd.f32 %v238, %v312
  %v314 = vpop.f32.mrb[0].mxu0
  %v315 = vpop.f32.mrb[0].mxu0
  %v316 = vadd.f32 %v238, %v315
  %v317 = vpop.f32.mrb[0].mxu0
  %318 = vmatprep.mubr.bf16.mxu0 0
  %319 = vmatmul.mubr.bf16.gmra.mrb[0].mxu0 %v254
  %v320 = vpop.f32.mrb[0].mxu0
  %v321 = vadd.f32 %v238, %v320
  %v322 = vpop.f32.mrb[0].mxu0
  %v323 = vpop.f32.mrb[0].mxu0
  %v324 = vadd.f32 %v238, %v323
  %v325 = vpop.f32.mrb[0].mxu0
  %326 = vmatprep.mubr.bf16.mxu0 0
  %327 = vmatmul.mubr.bf16.gmra.mrb[0].mxu0 %v257
  %v328 = vpop.f32.mrb[0].mxu0
  %v329 = vadd.f32 %v238, %v328
  %v330 = vpop.f32.mrb[0].mxu0
  %v331 = vpop.f32.mrb[0].mxu0
  %v332 = vadd.f32 %v238, %v331
  %v333 = vpop.f32.mrb[0].mxu0
  %334 = vmatprep.mubr.bf16.mxu0 0
  %335 = vmatmul.mubr.bf16.gmra.mrb[0].mxu0 %v260
  %v336 = vpop.f32.mrb[0].mxu0
  %v337 = vadd.f32 %v238, %v336
  %v338 = vpop.f32.mrb[0].mxu0
  %v339 = vpop.f32.mrb[0].mxu0
  %v340 = vadd.f32 %v238, %v339
  %v341 = vpop.f32.mrb[0].mxu0
  %342 = vmatprep.mubr.bf16.mxu0 0
  %343 = vmatmul.mubr.bf16.gmra.mrb[0].mxu0 %v263
  %v344 = vpop.f32.mrb[0].mxu0
  %v345 = vadd.f32 %v238, %v344
  %v346 = vpop.f32.mrb[0].mxu0
  %v347 = vpop.f32.mrb[0].mxu0
  %v348 = vadd.f32 %v238, %v347
  %v349 = vpop.f32.mrb[0].mxu0
  %350 = vmatprep.mubr.bf16.mxu0 0
  %351 = vmatmul.mubr.bf16.gmra.mrb[0].mxu0 %v266
  %v352 = vpop.f32.mrb[0].mxu0
  %v353 = vadd.f32 %v238, %v352
  %v354 = vpop.f32.mrb[0].mxu0
  %v355 = vpop.f32.mrb[0].mxu0
  %v356 = vadd.f32 %v238, %v355
  %v357 = vpop.f32.mrb[0].mxu0
  %358 = vmatprep.mubr.bf16.mxu0 0
  %359 = vmatmul.mubr.bf16.gmra.mrb[0].mxu0 %v269
  %v360 = vpop.f32.mrb[0].mxu0
  %v361 = vadd.f32 %v238, %v360
  %v362 = vpop.f32.mrb[0].mxu0
  %v363 = vpop.f32.mrb[0].mxu0
  %v364 = vadd.f32 %v238, %v363
  %v365 = vpop.f32.mrb[0].mxu0
  %366 = vmatprep.mubr.bf16.mxu0 0
  %367 = vmatmul.mubr.bf16.gmra.mrb[0].mxu0 %v272
  %v368 = vpop.f32.mrb[0].mxu0
  %v369 = vadd.f32 %v238, %v368
  %v370 = vpop.f32.mrb[0].mxu0
  %v371 = vpop.f32.mrb[0].mxu0
  %v372 = vadd.f32 %v238, %v371
  %v373 = vpop.f32.mrb[0].mxu0
  %374 = vdwg.mxu0
  %v375 = vmax.f32 %v313, 0.0
  %v376 = vmax.f32 %v316, 0.0
  %v377 = vmax.f32 %v321, 0.0
  %v378 = vmax.f32 %v324, 0.0
  %v379 = vmax.f32 %v329, 0.0
  %v380 = vmax.f32 %v332, 0.0
  %v381 = vmax.f32 %v337, 0.0
  %v382 = vmax.f32 %v340, 0.0
  %v383 = vmax.f32 %v345, 0.0
  %v384 = vmax.f32 %v348, 0.0
  %v385 = vmax.f32 %v353, 0.0
  %v386 = vmax.f32 %v356, 0.0
  %v387 = vmax.f32 %v361, 0.0
  %v388 = vmax.f32 %v364, 0.0
  %v389 = vmax.f32 %v369, 0.0
  %v390 = vmax.f32 %v372, 0.0
  %v391 = vpack.c.bf16 %v376, %v375
  %v392 = vpack.c.bf16 %v378, %v377
  %v393 = vpack.c.bf16 %v380, %v379
  %v394 = vpack.c.bf16 %v382, %v381
  %v395 = vpack.c.bf16 %v384, %v383
  %v396 = vpack.c.bf16 %v386, %v385
  %v397 = vpack.c.bf16 %v388, %v387
  %v398 = vpack.c.bf16 %v390, %v389
  %v399 = vld [vmem:[%s5] sm:$0xf]
  %v400 = vld [vmem:[%s5 + $0x4] sm:$0x3]
  %v401 = vld [vmem:[#allocation2] sm:$0x1]
  %v403 = vlaneseq
  %v404 = vshrl.u32 %v403, 7
  %v405 = vsub.s32 0, %v404
  %v406 = vrot.slane %v401, %v405
  %v410 = vunpack.c.l.b16 %v399
  %v411 = vunpack.c.l.b16 %v400
  %v412 = vpack.c.b16 %v411, %v410
  %vm413 = vcmask 97280
  %v415 = vsel %vm413, %v391, 0
  %v418 = vsel %vm413, %v392, 0
  %v421 = vsel %vm413, %v393, 0
  %v424 = vsel %vm413, %v394, 0
  %v427 = vsel %vm413, %v395, 0
  %v430 = vsel %vm413, %v396, 0
  %v433 = vsel %vm413, %v397, 0
  %v436 = vsel %vm413, %v398, 0
  %vm438 = vcmask 1045504
  %v440 = vsel %vm438, %v412, 0
  %442 = vmatprep.subr.bf16.mxu0 0
  %443 = vmatpush1.bf16.msra.mxu0 %v440
  %444 = vmatprep.subr.bf16.mxu0 0
  %445 = vmatpush1.bf16.msra.mxu0 0
  %446 = vmatprep.subr.bf16.mxu0 0
  %447 = vmatpush1.bf16.msra.mxu0 0
  %448 = vmatprep.subr.bf16.mxu0 0
  %449 = vmatpush1.bf16.msra.mxu0 0
  %450 = vmatprep.subr.bf16.mxu0 0
  %451 = vmatpush1.bf16.msra.mxu0 0
  %452 = vmatprep.subr.bf16.mxu0 0
  %453 = vmatpush1.bf16.msra.mxu0 0
  %454 = vmatprep.subr.bf16.mxu0 0
  %455 = vmatpush1.bf16.msra.mxu0 0
  %456 = vmatprep.subr.bf16.mxu0 0
  %457 = vmatpush1.bf16.msra.mxu0 0
  %458 = vmatprep.subr.bf16.mxu0 0
  %459 = vmatpush1.bf16.msra.mxu0 0
  %460 = vmatprep.subr.bf16.mxu0 0
  %461 = vmatpush1.bf16.msra.mxu0 0
  %462 = vmatprep.subr.bf16.mxu0 0
  %463 = vmatpush1.bf16.msra.mxu0 0
  %464 = vmatprep.subr.bf16.mxu0 0
  %465 = vmatpush1.bf16.msra.mxu0 0
  %466 = vmatprep.subr.bf16.mxu0 0
  %467 = vmatpush1.bf16.msra.mxu0 0
  %468 = vmatprep.subr.bf16.mxu0 0
  %469 = vmatpush1.bf16.msra.mxu0 0
  %470 = vmatprep.subr.bf16.mxu0 0
  %471 = vmatpush1.bf16.msra.mxu0 0
  %472 = vmatprep.subr.bf16.mxu0 0
  %473 = vmatpush1.bf16.msra.mxu0 0
  %474 = vmatprep.mubr.bf16.mxu0 0
  %475 = vmatmul.mubr.bf16.gmra.mrb[0].mxu0 %v415
  %v476 = vpop.f32.mrb[0].mxu0
  %v477 = vadd.f32 %v406, %v476
  %v478 = vpop.f32.mrb[0].mxu0
  %v479 = vpop.f32.mrb[0].mxu0
  %v480 = vadd.f32 %v406, %v479
  %v481 = vpop.f32.mrb[0].mxu0
  %482 = vmatprep.mubr.bf16.mxu0 0
  %483 = vmatmul.mubr.bf16.gmra.mrb[0].mxu0 %v418
  %v484 = vpop.f32.mrb[0].mxu0
  %v485 = vadd.f32 %v406, %v484
  %v486 = vpop.f32.mrb[0].mxu0
  %v487 = vpop.f32.mrb[0].mxu0
  %v488 = vadd.f32 %v406, %v487
  %v489 = vpop.f32.mrb[0].mxu0
  %490 = vmatprep.mubr.bf16.mxu0 0
  %491 = vmatmul.mubr.bf16.gmra.mrb[0].mxu0 %v421
  %v492 = vpop.f32.mrb[0].mxu0
  %v493 = vadd.f32 %v406, %v492
  %v494 = vpop.f32.mrb[0].mxu0
  %v495 = vpop.f32.mrb[0].mxu0
  %v496 = vadd.f32 %v406, %v495
  %v497 = vpop.f32.mrb[0].mxu0
  %498 = vmatprep.mubr.bf16.mxu0 0
  %499 = vmatmul.mubr.bf16.gmra.mrb[0].mxu0 %v424
  %v500 = vpop.f32.mrb[0].mxu0
  %v501 = vadd.f32 %v406, %v500
  %v502 = vpop.f32.mrb[0].mxu0
  %v503 = vpop.f32.mrb[0].mxu0
  %v504 = vadd.f32 %v406, %v503
  %v505 = vpop.f32.mrb[0].mxu0
  %506 = vmatprep.mubr.bf16.mxu0 0
  %507 = vmatmul.mubr.bf16.gmra.mrb[0].mxu0 %v427
  %v508 = vpop.f32.mrb[0].mxu0
  %v509 = vadd.f32 %v406, %v508
  %v510 = vpop.f32.mrb[0].mxu0
  %v511 = vpop.f32.mrb[0].mxu0
  %v512 = vadd.f32 %v406, %v511
  %v513 = vpop.f32.mrb[0].mxu0
  %514 = vmatprep.mubr.bf16.mxu0 0
  %515 = vmatmul.mubr.bf16.gmra.mrb[0].mxu0 %v430
  %v516 = vpop.f32.mrb[0].mxu0
  %v517 = vadd.f32 %v406, %v516
  %v518 = vpop.f32.mrb[0].mxu0
  %v519 = vpop.f32.mrb[0].mxu0
  %v520 = vadd.f32 %v406, %v519
  %v521 = vpop.f32.mrb[0].mxu0
  %522 = vmatprep.mubr.bf16.mxu0 0
  %523 = vmatmul.mubr.bf16.gmra.mrb[0].mxu0 %v433
  %v524 = vpop.f32.mrb[0].mxu0
  %v525 = vadd.f32 %v406, %v524
  %v526 = vpop.f32.mrb[0].mxu0
  %v527 = vpop.f32.mrb[0].mxu0
  %v528 = vadd.f32 %v406, %v527
  %v529 = vpop.f32.mrb[0].mxu0
  %530 = vmatprep.mubr.bf16.mxu0 0
  %531 = vmatmul.mubr.bf16.gmra.mrb[0].mxu0 %v436
  %v532 = vpop.f32.mrb[0].mxu0
  %v533 = vadd.f32 %v406, %v532
  %v534 = vpop.f32.mrb[0].mxu0
  %v535 = vpop.f32.mrb[0].mxu0
  %v536 = vadd.f32 %v406, %v535
  %v537 = vpop.f32.mrb[0].mxu0
  %538 = vdwg.mxu0
  %v539 = vxor.u32 %v477, 2147483648
  %v540 = vxor.u32 %v480, 2147483648
  %v541 = vxor.u32 %v485, 2147483648
  %v542 = vxor.u32 %v488, 2147483648
  %v543 = vxor.u32 %v493, 2147483648
  %v544 = vxor.u32 %v496, 2147483648
  %v545 = vxor.u32 %v501, 2147483648
  %v546 = vxor.u32 %v504, 2147483648
  %v547 = vxor.u32 %v509, 2147483648
  %v548 = vxor.u32 %v512, 2147483648
  %v549 = vxor.u32 %v517, 2147483648
  %v550 = vxor.u32 %v520, 2147483648
  %v551 = vxor.u32 %v525, 2147483648
  %v552 = vxor.u32 %v528, 2147483648
  %v553 = vxor.u32 %v533, 2147483648
  %v554 = vxor.u32 %v536, 2147483648
  %v555 = vmul.f32 %v539, 1.442695
  %v556 = vpow.pop %v555
  %v557 = vmul.f32 %v540, 1.442695
  %v558 = vpow.pop %v557
  %v559 = vmul.f32 %v541, 1.442695
  %v560 = vpow.pop %v559
  %v561 = vmul.f32 %v542, 1.442695
  %v562 = vpow.pop %v561
  %v563 = vmul.f32 %v543, 1.442695
  %v564 = vpow.pop %v563
  %v565 = vmul.f32 %v544, 1.442695
  %v566 = vpow.pop %v565
  %v567 = vmul.f32 %v545, 1.442695
  %v568 = vpow.pop %v567
  %v569 = vmul.f32 %v546, 1.442695
  %v570 = vpow.pop %v569
  %v571 = vmul.f32 %v547, 1.442695
  %v572 = vpow.pop %v571
  %v573 = vmul.f32 %v548, 1.442695
  %v574 = vpow.pop %v573
  %v575 = vmul.f32 %v549, 1.442695
  %v576 = vpow.pop %v575
  %v577 = vmul.f32 %v550, 1.442695
  %v578 = vpow.pop %v577
  %v579 = vmul.f32 %v551, 1.442695
  %v580 = vpow.pop %v579
  %v581 = vmul.f32 %v552, 1.442695
  %v582 = vpow.pop %v581
  %v583 = vmul.f32 %v553, 1.442695
  %v584 = vpow.pop %v583
  %v585 = vmul.f32 %v554, 1.442695
  %v586 = vpow.pop %v585
  %v587 = vadd.f32 %v556, 1.0
  %v588 = vadd.f32 %v558, 1.0
  %v589 = vadd.f32 %v560, 1.0
  %v590 = vadd.f32 %v562, 1.0
  %v591 = vadd.f32 %v564, 1.0
  %v592 = vadd.f32 %v566, 1.0
  %v593 = vadd.f32 %v568, 1.0
  %v594 = vadd.f32 %v570, 1.0
  %v595 = vadd.f32 %v572, 1.0
  %v596 = vadd.f32 %v574, 1.0
  %v597 = vadd.f32 %v576, 1.0
  %v598 = vadd.f32 %v578, 1.0
  %v599 = vadd.f32 %v580, 1.0
  %v600 = vadd.f32 %v582, 1.0
  %v601 = vadd.f32 %v584, 1.0
  %v602 = vadd.f32 %v586, 1.0
  %v603 = vrcp.pop %v587
  %v604 = vmul.f32 1.0, %v603
  %v605 = vrcp.pop %v588
  %v606 = vmul.f32 1.0, %v605
  %v607 = vrcp.pop %v589
  %v608 = vmul.f32 1.0, %v607
  %v609 = vrcp.pop %v590
  %v610 = vmul.f32 1.0, %v609
  %v611 = vrcp.pop %v591
  %v612 = vmul.f32 1.0, %v611
  %v613 = vrcp.pop %v592
  %v614 = vmul.f32 1.0, %v613
  %v615 = vrcp.pop %v593
  %v616 = vmul.f32 1.0, %v615
  %v617 = vrcp.pop %v594
  %v618 = vmul.f32 1.0, %v617
  %v619 = vrcp.pop %v595
  %v620 = vmul.f32 1.0, %v619
  %v621 = vrcp.pop %v596
  %v622 = vmul.f32 1.0, %v621
  %v623 = vrcp.pop %v597
  %v624 = vmul.f32 1.0, %v623
  %v625 = vrcp.pop %v598
  %v626 = vmul.f32 1.0, %v625
  %v627 = vrcp.pop %v599
  %v628 = vmul.f32 1.0, %v627
  %v629 = vrcp.pop %v600
  %v630 = vmul.f32 1.0, %v629
  %v631 = vrcp.pop %v601
  %v632 = vmul.f32 1.0, %v631
  %v633 = vrcp.pop %v602
  %v634 = vmul.f32 1.0, %v633
  %635 = vxpose.xlu0.b32.start [1/16] %v604, 128
  %636 = vxpose.xlu0.b32.cont [2/16] %v606, 128
  %637 = vxpose.xlu0.b32.cont [3/16] %v608, 128
  %638 = vxpose.xlu0.b32.cont [4/16] %v610, 128
  %639 = vxpose.xlu0.b32.cont [5/16] %v612, 128
  %640 = vxpose.xlu0.b32.cont [6/16] %v614, 128
  %641 = vxpose.xlu0.b32.cont [7/16] %v616, 128
  %642 = vxpose.xlu0.b32.cont [8/16] %v618, 128
  %643 = vxpose.xlu0.b32.cont [9/16] %v620, 128
  %644 = vxpose.xlu0.b32.cont [10/16] %v622, 128
  %645 = vxpose.xlu0.b32.cont [11/16] %v624, 128
  %646 = vxpose.xlu0.b32.cont [12/16] %v626, 128
  %647 = vxpose.xlu0.b32.cont [13/16] %v628, 128
  %648 = vxpose.xlu0.b32.cont [14/16] %v630, 128
  %649 = vxpose.xlu0.b32.cont [15/16] %v632, 128
  %650 = vxpose.xlu0.b32.end [16/16] %v634, 128
  %v651 = vpop.trf.xlu0
  %v652 = vpop.trf.xlu0
  %v653 = vpop.trf.xlu0
  %v654 = vpop.trf.xlu0
  %v655 = vpop.trf.xlu0
  %v656 = vpop.trf.xlu0
  %v657 = vpop.trf.xlu0
  %v658 = vpop.trf.xlu0
  %v659 = vpop.trf.xlu0
  %v660 = vpop.trf.xlu0
  %v661 = vpop.trf.xlu0
  %v662 = vpop.trf.xlu0
  %v663 = vpop.trf.xlu0
  %v664 = vpop.trf.xlu0
  %v665 = vpop.trf.xlu0
  %v666 = vpop.trf.xlu0
  %667 = vst [vmem:[%s7] sm:$0x1] %v651
  // Predicated region
  $region30: #{mlp_forward.1} parent=0 // pred_check
    _
  $region31: #{mlp_forward.1} parent=0 // pred_check_branch
    %669 = sbr.rel (0) target = $region33
  $region32: #{mlp_forward.1} parent=0 // pred_region
    _
  $region33: #{mlp_forward.1} parent=0 // pred_fallthru
    _
  // Predicated region
  $region34: #{mlp_forward.1} parent=0 // pred_check
    _
  $region35: #{mlp_forward.1} parent=0 // pred_check_branch
    %671 = sbr.rel (0) target = $region37
  $region36: #{mlp_forward.1} parent=0 // pred_region
    _
  $region37: #{mlp_forward.1} parent=0 // pred_fallthru
    _

</llo_original>
